<compile_context>
chip_gen: v6e
topology: v6e:2x2x1
jax: 0.10.0
libtpu: 0.0.40
codegen_flags: <defaults>
</compile_context>

<pallas_src>
import numpy as np
import jax
import jax.numpy as jnp
from jax.experimental import pallas as pl
from jax.experimental.pallas import tpu as pltpu


def dice_ce_kernel(x_ref, t_ref, inter_out, pt_out, bce_out,
                   inter_acc, pt_acc, bce_acc):
    """Grid: (core, column-tile).  Axis 1 is the reduction over features."""
    j = pl.program_id(1)

    @pl.when(j == 0)
    def _():
        inter_acc[...] = jnp.zeros_like(inter_acc)
        pt_acc[...] = jnp.zeros_like(pt_acc)
        bce_acc[...] = jnp.zeros_like(bce_acc)

    x = x_ref[...].astype(jnp.float32)           # (ROWS, TILE_N) logits
    t = t_ref[...].astype(jnp.float32)           # (ROWS, TILE_N) targets
    p = jax.nn.sigmoid(x)                        # EUP

    # Pure VALU accumulation in the hot loop (no cross-lane reduce here).
    inter_acc[...] += p * t
    pt_acc[...] += p + t
    # BCE-with-logits reusing the sigmoid:
    #   max(x,0) - x*t + log1p(exp(-|x|)) == max(x,0) - x*t - log(where(x>=0, p, 1-p))
    bce_acc[...] += (jnp.maximum(x, 0.0) - x * t
                     - jnp.log(jnp.where(x >= 0.0, p, 1.0 - p)))

    @pl.when(j == pl.num_programs(1) - 1)
    def _():
        # One XLU lane-reduce per accumulator, once per core.
        inter_out[...] = jnp.sum(inter_acc[...], axis=1, keepdims=True)
        pt_out[...] = jnp.sum(pt_acc[...], axis=1, keepdims=True)
        bce_out[...] = jnp.sum(bce_acc[...], axis=1, keepdims=True)


def dice_ce_loss(y_pred, y_true, *, eps=1.0, num_cores=2,
                 vmem_budget_bytes=16 * 1024 * 1024):
    """Pallas implementation of DiceCELoss.forward (hard_label=False dice + BCE)."""
    B = y_pred.shape[0]
    N = int(np.prod(y_pred.shape[1:]))
    x = jnp.reshape(y_pred, (B, N))              # no dtype cast in the wrapper
    t = jnp.reshape(y_true, (B, N))

    # --- sublane packing: split each batch row into G sub-rows, ROWS % 8 == 0.
    G = 1
    while (B * G) % 8 != 0:
        G += 1
    rows = B * G

    def _round_up(a, m):
        return ((a + m - 1) // m) * m

    # --- lane tile sized from a VMEM budget (2 inputs x 2 bufs + 3 f32 accs).
    bytes_per_col = rows * (2 * x.dtype.itemsize + 2 * t.dtype.itemsize + 3 * 4)
    cap = max(128, (vmem_budget_bytes // bytes_per_col) // 128 * 128)
    cap = min(cap, 8192)

    n_sub_raw = -(-N // G)                                   # ceil(N / G)
    tile_n = min(cap, _round_up(-(-n_sub_raw // num_cores), 128))
    n_sub = _round_up(n_sub_raw, num_cores * tile_n)
    cols_per_core = n_sub // num_cores
    tiles_per_core = cols_per_core // tile_n

    # --- neutral padding (sigmoid(-1e4)=0, log(1-0)=0 -> exact-zero contribs).
    pad = G * n_sub - N
    if pad:
        x = jnp.pad(x, ((0, 0), (0, pad)), constant_values=-1e4)
        t = jnp.pad(t, ((0, 0), (0, pad)), constant_values=0)
    x = jnp.reshape(x, (rows, n_sub))
    t = jnp.reshape(t, (rows, n_sub))

    in_map = lambda c, j: (0, c * tiles_per_core + j)
    out_map = lambda c, j: (c, 0, 0)
    part_shape = jax.ShapeDtypeStruct((num_cores, rows, 1), jnp.float32)

    inter_p, pt_p, bce_p = pl.pallas_call(
        dice_ce_kernel,
        out_shape=(part_shape, part_shape, part_shape),
        grid_spec=pltpu.PrefetchScalarGridSpec(
            num_scalar_prefetch=0,
            grid=(num_cores, tiles_per_core),
            in_specs=[
                pl.BlockSpec((rows, tile_n), in_map),
                pl.BlockSpec((rows, tile_n), in_map),
            ],
            out_specs=[
                pl.BlockSpec((None, rows, 1), out_map),
                pl.BlockSpec((None, rows, 1), out_map),
                pl.BlockSpec((None, rows, 1), out_map),
            ],
            scratch_shapes=[
                pltpu.VMEM((rows, tile_n), jnp.float32),   # sum(sigmoid(x)*y)
                pltpu.VMEM((rows, tile_n), jnp.float32),   # sum(sigmoid(x)) + sum(y)
                pltpu.VMEM((rows, tile_n), jnp.float32),   # BCE partials
            ],
        ),
        compiler_params=pltpu.CompilerParams(
            dimension_semantics=("parallel", "arbitrary"),
            vmem_limit_bytes=32 * 1024 * 1024,
        ),
    )(x, t)

    # Tiny epilogue: combine per-core / per-sub-row partials into per-batch sums.
    inter_b = jnp.sum(inter_p, axis=(0, 2)).reshape(B, G).sum(axis=1)   # (B,)
    pt_b = jnp.sum(pt_p, axis=(0, 2)).reshape(B, G).sum(axis=1)         # (B,)
    bce_total = jnp.sum(bce_p)

    dice = jnp.mean(1.0 - (2.0 * inter_b + eps) / (pt_b + eps))
    ce = bce_total / (B * N)
    return dice + ce


def _reference(y_pred, y_true, eps=1.0):
    """Pure-JAX reference matching the PyTorch module."""
    B = y_pred.shape[0]
    x = jnp.reshape(y_pred, (B, -1)).astype(jnp.float32)
    t = jnp.reshape(y_true, (B, -1)).astype(jnp.float32)
    p = jax.nn.sigmoid(x)
    up = 2.0 * jnp.sum(p * t, axis=1) + eps
    down = jnp.sum(p, axis=1) + jnp.sum(t, axis=1) + eps
    dice = jnp.mean(1.0 - up / down)
    bce = jnp.mean(jnp.maximum(x, 0.0) - x * t + jnp.log1p(jnp.exp(-jnp.abs(x))))
    return dice + bce


if __name__ == "__main__":
    key = jax.random.PRNGKey(0)
    k1, k2 = jax.random.split(key)

    # Small shapes consistent with a segmentation logit map: (B, C, H, W)
    B, C, H, W = 2, 4, 16, 16
    y_pred = jax.random.normal(k1, (B, C, H, W), dtype=jnp.float32)
    y_true = jax.random.bernoulli(k2, 0.5, (B, C, H, W)).astype(jnp.float32)

    loss = jax.block_until_ready(dice_ce_loss(y_pred, y_true))
    ref = jax.block_until_ready(_reference(y_pred, y_true))

    np.testing.assert_allclose(np.asarray(loss), np.asarray(ref),
                               rtol=1e-4, atol=1e-4)
    print("KERNEL_OK")
</pallas_src>

<mosaic_0001>
module attributes {stable_mosaic.version = 11 : i64} {
  func.func @dice_ce_kernel(%arg0: i32, %arg1: i32, %arg2: memref<8x128xf32, #tpu.memory_space<vmem>>, %arg3: memref<8x128xf32, #tpu.memory_space<vmem>>, %arg4: memref<1x8x1xf32, #tpu.memory_space<vmem>>, %arg5: memref<1x8x1xf32, #tpu.memory_space<vmem>>, %arg6: memref<1x8x1xf32, #tpu.memory_space<vmem>>, %arg7: memref<8x128xf32, #tpu.memory_space<vmem>>, %arg8: memref<8x128xf32, #tpu.memory_space<vmem>>, %arg9: memref<8x128xf32, #tpu.memory_space<vmem>>) attributes {dimension_semantics = [#tpu.dimension_semantics<parallel>, #tpu.dimension_semantics<arbitrary>], iteration_bounds = array<i64: 2, 1>, scalar_prefetch = 0 : i64, scratch_operands = 3 : i64, tpu.core_type = #tpu.core_type<tc>, window_params = [{transform_indices = @transform_0, window_bounds = array<i64: 8, 128>}, {transform_indices = @transform_1, window_bounds = array<i64: 8, 128>}, {transform_indices = @transform_2, window_bounds = array<i64: 1, 8, 1>}, {transform_indices = @transform_3, window_bounds = array<i64: 1, 8, 1>}, {transform_indices = @transform_4, window_bounds = array<i64: 1, 8, 1>}]} {
    %c0_i32 = arith.constant 0 : i32
    %0 = arith.cmpi eq, %arg1, %c0_i32 : i32
    %1 = arith.extui %0 : i1 to i32
    %c0_i32_0 = arith.constant 0 : i32
    %2 = arith.cmpi ne, %1, %c0_i32_0 : i32
    scf.if %2 {
      %cst_21 = arith.constant 0.000000e+00 : f32
      %35 = vector.broadcast %cst_21 : f32 to vector<8x128xf32>
      %c0_22 = arith.constant 0 : index
      %c0_23 = arith.constant 0 : index
      %36 = vector.load %arg7[%c0_22, %c0_23] : memref<8x128xf32, #tpu.memory_space<vmem>>, vector<8x128xf32>
      tpu.vector_store %arg7[%c0_22, %c0_23], %35 {strides = array<i32>} : memref<8x128xf32, #tpu.memory_space<vmem>>, vector<8x128xf32>,
      %cst_24 = arith.constant 0.000000e+00 : f32
      %37 = vector.broadcast %cst_24 : f32 to vector<8x128xf32>
      %c0_25 = arith.constant 0 : index
      %c0_26 = arith.constant 0 : index
      %38 = vector.load %arg8[%c0_25, %c0_26] : memref<8x128xf32, #tpu.memory_space<vmem>>, vector<8x128xf32>
      tpu.vector_store %arg8[%c0_25, %c0_26], %37 {strides = array<i32>} : memref<8x128xf32, #tpu.memory_space<vmem>>, vector<8x128xf32>,
      %cst_27 = arith.constant 0.000000e+00 : f32
      %39 = vector.broadcast %cst_27 : f32 to vector<8x128xf32>
      %c0_28 = arith.constant 0 : index
      %c0_29 = arith.constant 0 : index
      %40 = vector.load %arg9[%c0_28, %c0_29] : memref<8x128xf32, #tpu.memory_space<vmem>>, vector<8x128xf32>
      tpu.vector_store %arg9[%c0_28, %c0_29], %39 {strides = array<i32>} : memref<8x128xf32, #tpu.memory_space<vmem>>, vector<8x128xf32>,
    } else {
    }
    %c0 = arith.constant 0 : index
    %c0_1 = arith.constant 0 : index
    %3 = vector.load %arg2[%c0, %c0_1] : memref<8x128xf32, #tpu.memory_space<vmem>>, vector<8x128xf32>
    %c0_2 = arith.constant 0 : index
    %c0_3 = arith.constant 0 : index
    %4 = vector.load %arg3[%c0_2, %c0_3] : memref<8x128xf32, #tpu.memory_space<vmem>>, vector<8x128xf32>
    %5 = arith.negf %3 : vector<8x128xf32>
    %6 = math.exp %5 : vector<8x128xf32>
    %cst = arith.constant 1.000000e+00 : f32
    %7 = vector.broadcast %cst : f32 to vector<8x128xf32>
    %8 = arith.addf %7, %6 : vector<8x128xf32>
    %9 = arith.divf %7, %8 : vector<8x128xf32>
    %c0_4 = arith.constant 0 : index
    %c0_5 = arith.constant 0 : index
    %10 = vector.load %arg7[%c0_4, %c0_5] : memref<8x128xf32, #tpu.memory_space<vmem>>, vector<8x128xf32>
    %11 = arith.mulf %9, %4 : vector<8x128xf32>
    %12 = arith.addf %10, %11 : vector<8x128xf32>
    %c0_6 = arith.constant 0 : index
    %c0_7 = arith.constant 0 : index
    %13 = vector.load %arg7[%c0_6, %c0_7] : memref<8x128xf32, #tpu.memory_space<vmem>>, vector<8x128xf32>
    tpu.vector_store %arg7[%c0_6, %c0_7], %12 {strides = array<i32>} : memref<8x128xf32, #tpu.memory_space<vmem>>, vector<8x128xf32>,
    %c0_8 = arith.constant 0 : index
    %c0_9 = arith.constant 0 : index
    %14 = vector.load %arg8[%c0_8, %c0_9] : memref<8x128xf32, #tpu.memory_space<vmem>>, vector<8x128xf32>
    %15 = arith.addf %9, %4 : vector<8x128xf32>
    %16 = arith.addf %14, %15 : vector<8x128xf32>
    %c0_10 = arith.constant 0 : index
    %c0_11 = arith.constant 0 : index
    %17 = vector.load %arg8[%c0_10, %c0_11] : memref<8x128xf32, #tpu.memory_space<vmem>>, vector<8x128xf32>
    tpu.vector_store %arg8[%c0_10, %c0_11], %16 {strides = array<i32>} : memref<8x128xf32, #tpu.memory_space<vmem>>, vector<8x128xf32>,
    %c0_12 = arith.constant 0 : index
    %c0_13 = arith.constant 0 : index
    %18 = vector.load %arg9[%c0_12, %c0_13] : memref<8x128xf32, #tpu.memory_space<vmem>>, vector<8x128xf32>
    %cst_14 = arith.constant 0.000000e+00 : f32
    %19 = vector.broadcast %cst_14 : f32 to vector<8x128xf32>
    %20 = arith.maximumf %3, %19 : vector<8x128xf32>
    %21 = arith.mulf %3, %4 : vector<8x128xf32>
    %22 = arith.subf %20, %21 : vector<8x128xf32>
    %cst_15 = arith.constant 0.000000e+00 : f32
    %23 = vector.broadcast %cst_15 : f32 to vector<8x128xf32>
    %24 = arith.cmpf oge, %3, %23 : vector<8x128xf32>
    %cst_16 = arith.constant 1.000000e+00 : f32
    %25 = vector.broadcast %cst_16 : f32 to vector<8x128xf32>
    %26 = arith.subf %25, %9 : vector<8x128xf32>
    %27 = arith.select %24, %9, %26 : vector<8x128xi1>, vector<8x128xf32>
    %28 = math.log %27 : vector<8x128xf32>
    %29 = arith.subf %22, %28 : vector<8x128xf32>
    %30 = arith.addf %18, %29 : vector<8x128xf32>
    %c0_17 = arith.constant 0 : index
    %c0_18 = arith.constant 0 : index
    %31 = vector.load %arg9[%c0_17, %c0_18] : memref<8x128xf32, #tpu.memory_space<vmem>>, vector<8x128xf32>
    tpu.vector_store %arg9[%c0_17, %c0_18], %30 {strides = array<i32>} : memref<8x128xf32, #tpu.memory_space<vmem>>, vector<8x128xf32>,
    %c0_i32_19 = arith.constant 0 : i32
    %32 = arith.cmpi eq, %arg1, %c0_i32_19 : i32
    %33 = arith.extui %32 : i1 to i32
    %c0_i32_20 = arith.constant 0 : i32
    %34 = arith.cmpi ne, %33, %c0_i32_20 : i32
    scf.if %34 {
      %c0_21 = arith.constant 0 : index
      %c0_22 = arith.constant 0 : index
      %35 = vector.load %arg7[%c0_21, %c0_22] : memref<8x128xf32, #tpu.memory_space<vmem>>, vector<8x128xf32>
      %cst_23 = arith.constant dense<0.000000e+00> : vector<8xf32>
      %36 = vector.multi_reduction <add>, %35, %cst_23 [1] : vector<8x128xf32> to vector<8xf32>
      %37 = vector.shape_cast %36 : vector<8xf32> to vector<8x1xf32>
      %c0_24 = arith.constant 0 : index
      %c0_25 = arith.constant 0 : index
      %c0_26 = arith.constant 0 : index
      %38 = vector.load %arg4[%c0_24, %c0_25, %c0_26] : memref<1x8x1xf32, #tpu.memory_space<vmem>>, vector<1x8x1xf32>
      %39 = vector.shape_cast %38 : vector<1x8x1xf32> to vector<8x1xf32>
      %40 = vector.shape_cast %37 : vector<8x1xf32> to vector<1x8x1xf32>
      tpu.vector_store %arg4[%c0_24, %c0_25, %c0_26], %40 {strides = array<i32>} : memref<1x8x1xf32, #tpu.memory_space<vmem>>, vector<1x8x1xf32>,
      %c0_27 = arith.constant 0 : index
      %c0_28 = arith.constant 0 : index
      %41 = vector.load %arg8[%c0_27, %c0_28] : memref<8x128xf32, #tpu.memory_space<vmem>>, vector<8x128xf32>
      %cst_29 = arith.constant dense<0.000000e+00> : vector<8xf32>
      %42 = vector.multi_reduction <add>, %41, %cst_29 [1] : vector<8x128xf32> to vector<8xf32>
      %43 = vector.shape_cast %42 : vector<8xf32> to vector<8x1xf32>
      %c0_30 = arith.constant 0 : index
      %c0_31 = arith.constant 0 : index
      %c0_32 = arith.constant 0 : index
      %44 = vector.load %arg5[%c0_30, %c0_31, %c0_32] : memref<1x8x1xf32, #tpu.memory_space<vmem>>, vector<1x8x1xf32>
      %45 = vector.shape_cast %44 : vector<1x8x1xf32> to vector<8x1xf32>
      %46 = vector.shape_cast %43 : vector<8x1xf32> to vector<1x8x1xf32>
      tpu.vector_store %arg5[%c0_30, %c0_31, %c0_32], %46 {strides = array<i32>} : memref<1x8x1xf32, #tpu.memory_space<vmem>>, vector<1x8x1xf32>,
      %c0_33 = arith.constant 0 : index
      %c0_34 = arith.constant 0 : index
      %47 = vector.load %arg9[%c0_33, %c0_34] : memref<8x128xf32, #tpu.memory_space<vmem>>, vector<8x128xf32>
      %cst_35 = arith.constant dense<0.000000e+00> : vector<8xf32>
      %48 = vector.multi_reduction <add>, %47, %cst_35 [1] : vector<8x128xf32> to vector<8xf32>
      %49 = vector.shape_cast %48 : vector<8xf32> to vector<8x1xf32>
      %c0_36 = arith.constant 0 : index
      %c0_37 = arith.constant 0 : index
      %c0_38 = arith.constant 0 : index
      %50 = vector.load %arg6[%c0_36, %c0_37, %c0_38] : memref<1x8x1xf32, #tpu.memory_space<vmem>>, vector<1x8x1xf32>
      %51 = vector.shape_cast %50 : vector<1x8x1xf32> to vector<8x1xf32>
      %52 = vector.shape_cast %49 : vector<8x1xf32> to vector<1x8x1xf32>
      tpu.vector_store %arg6[%c0_36, %c0_37, %c0_38], %52 {strides = array<i32>} : memref<1x8x1xf32, #tpu.memory_space<vmem>>, vector<1x8x1xf32>,
    } else {
    }
    return
  }
  func.func @transform_0(%arg0: i32, %arg1: i32) -> (i32, i32) {
    %c1_i32 = arith.constant 1 : i32
    %0 = arith.muli %arg0, %c1_i32 : i32
    %1 = arith.addi %0, %arg1 : i32
    %c0_i32 = arith.constant 0 : i32
    %c0_i32_0 = arith.constant 0 : i32
    return %c0_i32, %1 : i32, i32
  }
  func.func @transform_1(%arg0: i32, %arg1: i32) -> (i32, i32) {
    %c1_i32 = arith.constant 1 : i32
    %0 = arith.muli %arg0, %c1_i32 : i32
    %1 = arith.addi %0, %arg1 : i32
    %c0_i32 = arith.constant 0 : i32
    %c0_i32_0 = arith.constant 0 : i32
    return %c0_i32, %1 : i32, i32
  }
  func.func @transform_2(%arg0: i32, %arg1: i32) -> (i32, i32, i32) {
    %c0_i32 = arith.constant 0 : i32
    %c0_i32_0 = arith.constant 0 : i32
    %c0_i32_1 = arith.constant 0 : i32
    return %arg0, %c0_i32, %c0_i32_0 : i32, i32, i32
  }
  func.func @transform_3(%arg0: i32, %arg1: i32) -> (i32, i32, i32) {
    %c0_i32 = arith.constant 0 : i32
    %c0_i32_0 = arith.constant 0 : i32
    %c0_i32_1 = arith.constant 0 : i32
    return %arg0, %c0_i32, %c0_i32_0 : i32, i32, i32
  }
  func.func @transform_4(%arg0: i32, %arg1: i32) -> (i32, i32, i32) {
    %c0_i32 = arith.constant 0 : i32
    %c0_i32_0 = arith.constant 0 : i32
    %c0_i32_1 = arith.constant 0 : i32
    return %arg0, %c0_i32, %c0_i32_0 : i32, i32, i32
  }
}

</mosaic_0001>

<llo_original>
// kernel: tpu_custom_call.1
$region0: #{tpu_custom_call.1}
  #allocation0 [shape = 'u32[]', space=smem, size = 0x4, offset = 0x4, fixed_abs, tag = 'smem constant byte address 0x4 - core index']
  #allocation1 [shape = 'u32[144,128]{1,0:T(1,128)}', space=vmem, size = 0x12000, scoped, tag = 'internal scratch']
  #allocation2 [shape = 'f32[8,128]{1,0:T(8,128)}', space=vmem, size = 0x1000, scoped, tag = 'scratch operand']
  #allocation3 [shape = 'f32[8,128]{1,0:T(8,128)}', space=vmem, size = 0x1000, scoped, tag = 'scratch operand']
  #allocation4 [shape = 'f32[8,128]{1,0:T(8,128)}', space=vmem, size = 0x1000, scoped, tag = 'scratch operand']
  %s0 = inlined_call_operand.hbm [shape: f32[8,256], index: 0, kind: input, shape index: {}]
  %s1 = inlined_call_operand.hbm [shape: f32[8,256], index: 1, kind: input, shape index: {}]
  %s2 = inlined_call_operand.vmem [shape: f32[2,8,1], index: 2, kind: output, shape index: {0}]
  %s3 = inlined_call_operand.vmem [shape: f32[2,8,1], index: 3, kind: output, shape index: {1}]
  %s4 = inlined_call_operand.vmem [shape: f32[2,8,1], index: 4, kind: output, shape index: {2}]
  %5 = xla_tuple %s2, %s3, %s4
  %s6 = sld [smem:[#allocation0]]
  $region73: #{tpu_custom_call.1} parent=0
    _
  %s8 = ssub.s32 1, %s6
  %s9 = scalar_select 0, %s8, %s6
  $region1: #{tpu_custom_call.1} parent=0
    #allocation5 [shape = 'u8[8192]{0}', space=vmem, size = 0x2000, scoped, tag = 'input window, operand 0']
    #allocation6 [shape = 's32[2]{0}', space=sflag, size = 0x8, scoped, tag = 'scoped memory for tpu_custom_call.1']
    #allocation7 [shape = 'u8[8192]{0}', space=vmem, size = 0x2000, scoped, tag = 'input window, operand 1']
    #allocation8 [shape = 's32[2]{0}', space=sflag, size = 0x8, scoped, tag = 'scoped memory for tpu_custom_call.1']
    %10 = vsyncpa [#allocation6], 0
    %s11 = scalar_lea.sflag [#allocation6], 1
    %12 = vsyncpa %s11, 0
    %13 = vsyncpa [#allocation8], 0
    %s14 = scalar_lea.sflag [#allocation8], 1
    %15 = vsyncpa %s14, 0
    loop: start=0, step=1, limit=4
    $region2: #{tpu_custom_call.1} parent=1 // loop_pre_header
      _
    $region3: #{tpu_custom_call.1} parent=1 // loop_header
      %s17 = sphi 0, %s21
      %p18 = scmp.ge.s32.totalorder %s17, 4
      %s24 = sphi 0, %s36
      %s25 = sphi 0, %s32
      %s26 = sphi 0, %s24
      %s27 = sphi 0, %s25
      %s28 = sphi 0, %s26
      %s29 = sphi 0, %s27
      %s41 = sphi 0, %s43
      %s44 = sphi 0, %s41
      %s45 = sphi 0, %s44
      %s61 = sphi 0, %s45
      %s69 = sphi 0, %s71
      %s72 = sphi 0, %s69
      %s73 = sphi 0, %s72
      %s89 = sphi 0, %s73
      %s95 = sphi 0, %s97
      %s98 = sphi 0, %s95
      %s99 = sphi 0, %s98
      %s115 = sphi 0, %s99
      %s121 = sphi 0, %s123
      %s124 = sphi 0, %s121
      %s125 = sphi 0, %s124
      %s141 = sphi 0, %s125
      %s147 = sphi 0, %s149
      %s150 = sphi 0, %s147
      %s151 = sphi 0, %s150
      %s167 = sphi 0, %s151
    $region4: #{tpu_custom_call.1} parent=1 // loop_header_branch
      %20 = sbr.rel (%p18) target = $region8
    $region5: #{tpu_custom_call.1} parent=1 // loop_body
      %s22 = ssub.s32 %s17, 1
      %s23 = ssub.s32 %s17, 2
      %s30 = sadd.s32 1, %s25
      %p31 = scmp.ge.s32.totalorder %s30, 1
      %s32 = scalar_select %p31, 0, %s30
      %s33 = sadd.s32 1, %s24
      %s34 = scalar_select %p31, %s33, %s24
      %p35 = scmp.ge.s32.totalorder %s34, 2
      %s36 = scalar_select %p35, 0, %s34
      %s37 = sadd.s32 %s24, %s25
      %s38 = sadd.s32 %s36, %s32
      %s39 = ssub.s32 %s37, %s38
      %p40 = scmp.eq.s32.totalorder %s39, 0
      %s42 = sadd.s32 %s41, 1
      %s43 = scalar_select %p40, %s41, %s42
      %p46 = pneg %p40
      %p47 = scmp.eq.s32.totalorder %s17, 1
      %p48 = por %p46, %p47
      %p49 = scmp.ne.s32.totalorder %s41, %s44
      %p50 = scmp.eq.s32.totalorder %s17, 0
      %p51 = por %p49, %p50
      %p52 = scmp.ne.s32.totalorder %s41, %s44
      %p53 = scmp.eq.s32.totalorder %s22, 1
      %p54 = por %p52, %p53
      %p55 = scmp.ne.s32.totalorder %s44, %s45
      %p56 = scmp.eq.s32.totalorder %s22, 0
      %p57 = por %p55, %p56
      %p58 = scmp.ne.s32.totalorder %s44, %s45
      %p59 = scmp.eq.s32.totalorder %s23, 1
      %p60 = por %p58, %p59
      %p62 = scmp.ne.s32.totalorder %s45, %s61
      %p63 = scmp.eq.s32.totalorder %s23, 0
      %p64 = por %p62, %p63
      %s65 = sadd.s32 %s24, %s25
      %s66 = sadd.s32 %s36, %s32
      %s67 = ssub.s32 %s65, %s66
      %p68 = scmp.eq.s32.totalorder %s67, 0
      %s70 = sadd.s32 %s69, 1
      %s71 = scalar_select %p68, %s69, %s70
      %p74 = pneg %p68
      %p75 = scmp.eq.s32.totalorder %s17, 1
      %p76 = por %p74, %p75
      %p77 = scmp.ne.s32.totalorder %s69, %s72
      %p78 = scmp.eq.s32.totalorder %s17, 0
      %p79 = por %p77, %p78
      %p80 = scmp.ne.s32.totalorder %s69, %s72
      %p81 = scmp.eq.s32.totalorder %s22, 1
      %p82 = por %p80, %p81
      %p83 = scmp.ne.s32.totalorder %s72, %s73
      %p84 = scmp.eq.s32.totalorder %s22, 0
      %p85 = por %p83, %p84
      %p86 = scmp.ne.s32.totalorder %s72, %s73
      %p87 = scmp.eq.s32.totalorder %s23, 1
      %p88 = por %p86, %p87
      %p90 = scmp.ne.s32.totalorder %s73, %s89
      %p91 = scmp.eq.s32.totalorder %s23, 0
      %p92 = por %p90, %p91
      %s93 = ssub.s32 %s24, %s36
      %p94 = scmp.eq.s32.totalorder %s93, 0
      %s96 = sadd.s32 %s95, 1
      %s97 = scalar_select %p94, %s95, %s96
      %p100 = pneg %p94
      %p101 = scmp.eq.s32.totalorder %s17, 1
      %p102 = por %p100, %p101
      %p103 = scmp.ne.s32.totalorder %s95, %s98
      %p104 = scmp.eq.s32.totalorder %s17, 0
      %p105 = por %p103, %p104
      %p106 = scmp.ne.s32.totalorder %s95, %s98
      %p107 = scmp.eq.s32.totalorder %s22, 1
      %p108 = por %p106, %p107
      %p109 = scmp.ne.s32.totalorder %s98, %s99
      %p110 = scmp.eq.s32.totalorder %s22, 0
      %p111 = por %p109, %p110
      %p112 = scmp.ne.s32.totalorder %s98, %s99
      %p113 = scmp.eq.s32.totalorder %s23, 1
      %p114 = por %p112, %p113
      %p116 = scmp.ne.s32.totalorder %s99, %s115
      %p117 = scmp.eq.s32.totalorder %s23, 0
      %p118 = por %p116, %p117
      %s119 = ssub.s32 %s24, %s36
      %p120 = scmp.eq.s32.totalorder %s119, 0
      %s122 = sadd.s32 %s121, 1
      %s123 = scalar_select %p120, %s121, %s122
      %p126 = pneg %p120
      %p127 = scmp.eq.s32.totalorder %s17, 1
      %p128 = por %p126, %p127
      %p129 = scmp.ne.s32.totalorder %s121, %s124
      %p130 = scmp.eq.s32.totalorder %s17, 0
      %p131 = por %p129, %p130
      %p132 = scmp.ne.s32.totalorder %s121, %s124
      %p133 = scmp.eq.s32.totalorder %s22, 1
      %p134 = por %p132, %p133
      %p135 = scmp.ne.s32.totalorder %s124, %s125
      %p136 = scmp.eq.s32.totalorder %s22, 0
      %p137 = por %p135, %p136
      %p138 = scmp.ne.s32.totalorder %s124, %s125
      %p139 = scmp.eq.s32.totalorder %s23, 1
      %p140 = por %p138, %p139
      %p142 = scmp.ne.s32.totalorder %s125, %s141
      %p143 = scmp.eq.s32.totalorder %s23, 0
      %p144 = por %p142, %p143
      %s145 = ssub.s32 %s24, %s36
      %p146 = scmp.eq.s32.totalorder %s145, 0
      %s148 = sadd.s32 %s147, 1
      %s149 = scalar_select %p146, %s147, %s148
      %p152 = pneg %p146
      %p153 = scmp.eq.s32.totalorder %s17, 1
      %p154 = por %p152, %p153
      %p155 = scmp.ne.s32.totalorder %s147, %s150
      %p156 = scmp.eq.s32.totalorder %s17, 0
      %p157 = por %p155, %p156
      %p158 = scmp.ne.s32.totalorder %s147, %s150
      %p159 = scmp.eq.s32.totalorder %s22, 1
      %p160 = por %p158, %p159
      %p161 = scmp.ne.s32.totalorder %s150, %s151
      %p162 = scmp.eq.s32.totalorder %s22, 0
      %p163 = por %p161, %p162
      %p164 = scmp.ne.s32.totalorder %s150, %s151
      %p165 = scmp.eq.s32.totalorder %s23, 1
      %p166 = por %p164, %p165
      %p168 = scmp.ne.s32.totalorder %s151, %s167
      %p169 = scmp.eq.s32.totalorder %s23, 0
      %p170 = por %p168, %p169
      %p171 = scmp.le.s32.totalorder 1, %s17
      %p172 = scmp.lt.s32.totalorder %s17, 3
      %p173 = pnand %p171, %p172
      %p174 = pneg %p173
      // Predicated region
      $region9: #{tpu_custom_call.1} parent=5 // pred_check
        _
      $region10: #{tpu_custom_call.1} parent=5 // pred_check_branch
        %176 = sbr.rel (%p173) target = $region12
      $region11: #{tpu_custom_call.1} parent=5 // pred_region
        %s177 = ssub.s32 %s17, 1
      $region12: #{tpu_custom_call.1} parent=5 // pred_fallthru
        _
      %p178 = scmp.lt.s32.totalorder %s17, 2
      // Predicated region
      $region13: #{tpu_custom_call.1} parent=5 // pred_check
        %p179 = pneg %p178
      $region14: #{tpu_custom_call.1} parent=5 // pred_check_branch
        %181 = sbr.rel (%p179) target = $region16
      $region15: #{tpu_custom_call.1} parent=5 // pred_region
        // Predicated region
        $region17: #{tpu_custom_call.1} parent=15 // pred_check
          %p182 = pneg %p51
        $region18: #{tpu_custom_call.1} parent=15 // pred_check_branch
          %184 = sbr.rel (%p182) target = $region20
        $region19: #{tpu_custom_call.1} parent=15 // pred_region
          %s185 = sand.u32 %s41, 1
          %s186 = scalar_lea.sflag [#allocation6], %s185
          %s187 = sand.u32 %s41, 1
          %s188 = smul.addr %s187, 8
          %s189 = scalar_lea.vmem [#allocation5], %s188
          %s190 = sadd.s32 %s24, %s25
          %s192 = ssub.s32 128, 128
          %193 = vsyncadd %s186, %s192
          %s194 = smul.addr %s190, 128
          %s195 = scalar_lea.hbm %s0, %s194
          %s197 = sshll.u32 %s189, 4
          %s198 = int_to_ptr.vmem [resolvable:$true] %s197
          %200 = dma.hbm_to_vmem [thread:$0]  %s195, 128, %s198, %s186
        $region20: #{tpu_custom_call.1} parent=15 // pred_fallthru
          _
        // Predicated region
        $region21: #{tpu_custom_call.1} parent=15 // pred_check
          %p201 = pneg %p79
        $region22: #{tpu_custom_call.1} parent=15 // pred_check_branch
          %203 = sbr.rel (%p201) target = $region24
        $region23: #{tpu_custom_call.1} parent=15 // pred_region
          %s204 = sand.u32 %s69, 1
          %s205 = scalar_lea.sflag [#allocation8], %s204
          %s206 = sand.u32 %s69, 1
          %s207 = smul.addr %s206, 8
          %s208 = scalar_lea.vmem [#allocation7], %s207
          %s209 = sadd.s32 %s24, %s25
          %s211 = ssub.s32 128, 128
          %212 = vsyncadd %s205, %s211
          %s213 = smul.addr %s209, 128
          %s214 = scalar_lea.hbm %s1, %s213
          %s216 = sshll.u32 %s208, 4
          %s217 = int_to_ptr.vmem [resolvable:$true] %s216
          %219 = dma.hbm_to_vmem [thread:$0]  %s214, 128, %s217, %s205
        $region24: #{tpu_custom_call.1} parent=15 // pred_fallthru
          _
      $region16: #{tpu_custom_call.1} parent=5 // pred_fallthru
        _
      %p220 = scmp.le.s32.totalorder 1, %s17
      %p221 = scmp.lt.s32.totalorder %s17, 3
      %p222 = pnand %p220, %p221
      %p223 = pneg %p222
      // Predicated region
      $region25: #{tpu_custom_call.1} parent=5 // pred_check
        _
      $region26: #{tpu_custom_call.1} parent=5 // pred_check_branch
        %225 = sbr.rel (%p222) target = $region28
      $region27: #{tpu_custom_call.1} parent=5 // pred_region
        %s226 = ssub.s32 %s17, 1
        %s227 = sand.u32 %s44, 1
        %s228 = scalar_lea.sflag [#allocation6], %s227
        %s229 = sand.u32 %s44, 1
        %s230 = smul.addr %s229, 8
        %s231 = scalar_lea.vmem [#allocation5], %s230
        // Predicated region
        $region29: #{tpu_custom_call.1} parent=27 // pred_check
          %p232 = pneg %p57
        $region30: #{tpu_custom_call.1} parent=27 // pred_check_branch
          %234 = sbr.rel (%p232) target = $region32
        $region31: #{tpu_custom_call.1} parent=27 // pred_region
          %235 = dma.done %s228, 128
        $region32: #{tpu_custom_call.1} parent=27 // pred_fallthru
          _
        %s236 = sand.u32 %s72, 1
        %s237 = scalar_lea.sflag [#allocation8], %s236
        %s238 = sand.u32 %s72, 1
        %s239 = smul.addr %s238, 8
        %s240 = scalar_lea.vmem [#allocation7], %s239
        // Predicated region
        $region33: #{tpu_custom_call.1} parent=27 // pred_check
          %p241 = pneg %p85
        $region34: #{tpu_custom_call.1} parent=27 // pred_check_branch
          %243 = sbr.rel (%p241) target = $region36
        $region35: #{tpu_custom_call.1} parent=27 // pred_region
          %244 = dma.done %s237, 128
        $region36: #{tpu_custom_call.1} parent=27 // pred_fallthru
          _
        %s245 = sand.u32 %s44, 1
        %s246 = scalar_lea.sflag [#allocation6], %s245
        %s247 = sand.u32 %s44, 1
        %s248 = smul.addr %s247, 8
        %s249 = scalar_lea.vmem [#allocation5], %s248
        %p250 = pneg %p57
        %p251 = pneg %p54
        %s252 = sand.u32 %s72, 1
        %s253 = scalar_lea.sflag [#allocation8], %s252
        %s254 = sand.u32 %s72, 1
        %s255 = smul.addr %s254, 8
        %s256 = scalar_lea.vmem [#allocation7], %s255
        %p257 = pneg %p85
        %p258 = pneg %p82
        %p259 = pneg %p111
        %p260 = pneg %p108
        %p261 = scmp.lt.s32.totalorder %s26, 1
        %s262 = scalar_select %p261, %s26, 1
        %s263 = smul.addr %s262, 8
        %s264 = scalar_lea.vmem %s2, %s263
        %p265 = pneg %p137
        %p266 = pneg %p134
        %p267 = scmp.lt.s32.totalorder %s26, 1
        %s268 = scalar_select %p267, %s26, 1
        %s269 = smul.addr %s268, 8
        %s270 = scalar_lea.vmem %s3, %s269
        %p271 = pneg %p163
        %p272 = pneg %p160
        %p273 = scmp.lt.s32.totalorder %s26, 1
        %s274 = scalar_select %p273, %s26, 1
        %s275 = smul.addr %s274, 8
        %s276 = scalar_lea.vmem %s4, %s275
        %s277 = sadd.s32 %s26, %s27
        %s278 = sadd.s32 %s26, %s27
        %p279 = scmp.lt.s32.totalorder %s26, 1
        %s280 = scalar_select %p279, %s26, 1
        %s281 = smul.addr %s280, 8
        %s282 = scalar_lea.vmem %s2, %s281
        %p283 = scmp.lt.s32.totalorder %s26, 1
        %s284 = scalar_select %p283, %s26, 1
        %s285 = smul.addr %s284, 8
        %s286 = scalar_lea.vmem %s3, %s285
        %p287 = scmp.lt.s32.totalorder %s26, 1
        %s288 = scalar_select %p287, %s26, 1
        %s289 = smul.addr %s288, 8
        %s290 = scalar_lea.vmem %s4, %s289
        %p291 = scmp.eq.s32.totalorder %s27, 0
        // Predicated region
        $region37: #{tpu_custom_call.1} parent=27 // pred_check
          %p292 = pneg %p291
        $region38: #{tpu_custom_call.1} parent=27 // pred_check_branch
          %294 = sbr.rel (%p292) target = $region40
        $region39: #{tpu_custom_call.1} parent=27 // pred_region
          %295 = vst [vmem:[#allocation2] sm:$0xff] 0.0
          %296 = vst [vmem:[#allocation3] sm:$0xff] 0.0
          %297 = vst [vmem:[#allocation4] sm:$0xff] 0.0
        $region40: #{tpu_custom_call.1} parent=27 // pred_fallthru
          _
        %v298 = vld [vmem:[%s231] sm:$0xff]
        %v299 = vld [vmem:[%s240] sm:$0xff]
        %v300 = vxor.u32 %v298, 2147483648
        %v301 = vmul.f32 %v300, 1.442695
        %v302 = vpow.pop %v301
        %v303 = vadd.f32 %v302, 1.0
        %v304 = vrcp.pop %v303
        %v305 = vmul.f32 1.0, %v304
        %v306 = vld [vmem:[#allocation2] sm:$0xff]
        %v307 = vmul.f32 %v305, %v299
        %v308 = vadd.f32 %v306, %v307
        %309 = vst [vmem:[#allocation2] sm:$0xff] %v308
        %v310 = vld [vmem:[#allocation3] sm:$0xff]
        %v311 = vadd.f32 %v305, %v299
        %v312 = vadd.f32 %v310, %v311
        %313 = vst [vmem:[#allocation3] sm:$0xff] %v312
        %v314 = vld [vmem:[#allocation4] sm:$0xff]
        %v315 = vmax.f32 %v298, 0.0
        %v316 = vmul.f32 %v298, %v299
        %v317 = vsub.f32 %v315, %v316
        %vm318 = vcmp.ge.f32.partialorder %v298, 0.0
        %v319 = vsub.f32 1.0, %v305
        %v320 = vsel %vm318, %v305, %v319
        %v321 = vlog2.pop %v320
        %v322 = vmul.f32 %v321, 0.6931472
        %v323 = vsub.f32 %v317, %v322
        %v324 = vadd.f32 %v314, %v323
        %325 = vst [vmem:[#allocation4] sm:$0xff] %v324
        // Predicated region
        $region41: #{tpu_custom_call.1} parent=27 // pred_check
          %p326 = pneg %p291
        $region42: #{tpu_custom_call.1} parent=27 // pred_check_branch
          %328 = sbr.rel (%p326) target = $region44
        $region43: #{tpu_custom_call.1} parent=27 // pred_region
          %v329 = vld [vmem:[#allocation2] sm:$0xff]
          %330 = vadd.xlane.f32.xlu0 %v329
          %v331 = vpop.xlane.xlu0 %330
          %vm332 = vcmask 7168
          %333 = vst.msk [vmem:[%s282] sm:$0xff] %vm332, %v331
          %v334 = vld [vmem:[#allocation3] sm:$0xff]
          %335 = vadd.xlane.f32.xlu0 %v334
          %v336 = vpop.xlane.xlu0 %335
          %337 = vst.msk [vmem:[%s286] sm:$0xff] %vm332, %v336
          %v338 = vld [vmem:[#allocation4] sm:$0xff]
          %339 = vadd.xlane.f32.xlu0 %v338
          %v340 = vpop.xlane.xlu0 %339
          %341 = vst.msk [vmem:[%s290] sm:$0xff] %vm332, %v340
        $region44: #{tpu_custom_call.1} parent=27 // pred_fallthru
          _
        %p342 = scmp.lt.s32.totalorder %s26, 1
        %s343 = scalar_select %p342, %s26, 1
        %s344 = smul.addr %s343, 8
        %s345 = scalar_lea.vmem %s2, %s344
        %p346 = scmp.lt.s32.totalorder %s26, 1
        %s347 = scalar_select %p346, %s26, 1
        %s348 = smul.addr %s347, 8
        %s349 = scalar_lea.vmem %s3, %s348
        %p350 = scmp.lt.s32.totalorder %s26, 1
        %s351 = scalar_select %p350, %s26, 1
        %s352 = smul.addr %s351, 8
        %s353 = scalar_lea.vmem %s4, %s352
        // Predicated region
        $region45: #{tpu_custom_call.1} parent=27 // pred_check
          %p354 = pneg %p108
        $region46: #{tpu_custom_call.1} parent=27 // pred_check_branch
          %356 = sbr.rel (%p354) target = $region48
        $region47: #{tpu_custom_call.1} parent=27 // pred_region
          _
        $region48: #{tpu_custom_call.1} parent=27 // pred_fallthru
          _
        // Predicated region
        $region49: #{tpu_custom_call.1} parent=27 // pred_check
          %p357 = pneg %p134
        $region50: #{tpu_custom_call.1} parent=27 // pred_check_branch
          %359 = sbr.rel (%p357) target = $region52
        $region51: #{tpu_custom_call.1} parent=27 // pred_region
          _
        $region52: #{tpu_custom_call.1} parent=27 // pred_fallthru
          _
        // Predicated region
        $region53: #{tpu_custom_call.1} parent=27 // pred_check
          %p360 = pneg %p160
        $region54: #{tpu_custom_call.1} parent=27 // pred_check_branch
          %362 = sbr.rel (%p360) target = $region56
        $region55: #{tpu_custom_call.1} parent=27 // pred_region
          _
        $region56: #{tpu_custom_call.1} parent=27 // pred_fallthru
          _
      $region28: #{tpu_custom_call.1} parent=5 // pred_fallthru
        _
      %p363 = scmp.le.s32.totalorder 2, %s17
      // Predicated region
      $region57: #{tpu_custom_call.1} parent=5 // pred_check
        %p364 = pneg %p363
      $region58: #{tpu_custom_call.1} parent=5 // pred_check_branch
        %366 = sbr.rel (%p364) target = $region60
      $region59: #{tpu_custom_call.1} parent=5 // pred_region
        %s367 = ssub.s32 %s17, 2
        // Predicated region
        $region61: #{tpu_custom_call.1} parent=59 // pred_check
          %p368 = pneg %p114
        $region62: #{tpu_custom_call.1} parent=59 // pred_check_branch
          %370 = sbr.rel (%p368) target = $region64
        $region63: #{tpu_custom_call.1} parent=59 // pred_region
          %p371 = scmp.lt.s32.totalorder %s28, 1
          %s372 = scalar_select %p371, %s28, 1
          %s373 = smul.addr %s372, 8
          %s374 = scalar_lea.vmem %s2, %s373
        $region64: #{tpu_custom_call.1} parent=59 // pred_fallthru
          _
        // Predicated region
        $region65: #{tpu_custom_call.1} parent=59 // pred_check
          %p375 = pneg %p140
        $region66: #{tpu_custom_call.1} parent=59 // pred_check_branch
          %377 = sbr.rel (%p375) target = $region68
        $region67: #{tpu_custom_call.1} parent=59 // pred_region
          %p378 = scmp.lt.s32.totalorder %s28, 1
          %s379 = scalar_select %p378, %s28, 1
          %s380 = smul.addr %s379, 8
          %s381 = scalar_lea.vmem %s3, %s380
        $region68: #{tpu_custom_call.1} parent=59 // pred_fallthru
          _
        // Predicated region
        $region69: #{tpu_custom_call.1} parent=59 // pred_check
          %p382 = pneg %p166
        $region70: #{tpu_custom_call.1} parent=59 // pred_check_branch
          %384 = sbr.rel (%p382) target = $region72
        $region71: #{tpu_custom_call.1} parent=59 // pred_region
          %p385 = scmp.lt.s32.totalorder %s28, 1
          %s386 = scalar_select %p385, %s28, 1
          %s387 = smul.addr %s386, 8
          %s388 = scalar_lea.vmem %s4, %s387
        $region72: #{tpu_custom_call.1} parent=59 // pred_fallthru
          _
      $region60: #{tpu_custom_call.1} parent=5 // pred_fallthru
        _
    $region6: #{tpu_custom_call.1} parent=1 // loop_footer
      %s21 = sadd.s32 1, %s17
    $region7: #{tpu_custom_call.1} parent=1 // loop_footer_branch
      %16 = sbr.rel target = $region3
    $region8: #{tpu_custom_call.1} parent=1 // loop_exit
      _
    %389 = vsyncpa [#allocation6], 1
    %s390 = scalar_lea.sflag [#allocation6], 1
    %391 = vsyncpa %s390, 1
    %392 = vsyncpa [#allocation8], 1
    %s393 = scalar_lea.sflag [#allocation8], 1
    %394 = vsyncpa %s393, 1

</llo_original>
